<compile_context>
chip_gen: v5e
topology: v5e:2x2
jax: 0.10.0
libtpu: 0.0.40
codegen_flags: <defaults>
</compile_context>

<pallas_src>
import functools

import jax
import jax.numpy as jnp
from jax.experimental import pallas as pl
from jax.experimental.pallas import tpu as pltpu


_BLOCK_BYTES = 6 * 1024 * 1024   # per-x-block cap: safe when double-buffered on v5e/v6e/v7x
_VMEM_LIMIT = 32 * 1024 * 1024


def _pick_tb(B):
    # Output block is (TB, TD): its sublane dim must be a multiple of 8 or the full B.
    return 8 if (B > 8 and B % 8 == 0) else B


def _pick_td(D, TB, n_batch_blocks, itemsize):
    """Hidden-dim tile: full D, or a multiple-of-128 divisor of D when a split helps."""
    if D <= 128 or D % 128 != 0:
        # TODO(synk): a very large D that is not a multiple of 128 is streamed as one
        # full-D block; pathological sizes would additionally need lane-tail handling.
        return D
    need_second_parallel_axis = n_batch_blocks < 2          # keep both v7x TensorCores busy
    too_big = TB * 8 * D * itemsize > _BLOCK_BYTES
    if not (need_second_parallel_axis or too_big):
        return D
    c = (D // 2) // 128 * 128
    while c >= 128:
        if D % c == 0:
            return c
        c -= 128
    return 128


def _pick_ts(S, TB, TD, itemsize):
    """Sequence tile: multiple of 8 (or the full S); sized to the per-block byte budget."""
    row_bytes = max(1, TB * TD * itemsize)
    budget = max(8, (_BLOCK_BYTES // row_bytes) // 8 * 8)
    cap = min(512, budget)
    if S <= cap:
        return S                                             # single k step, full-S block
    # Prefer a multiple-of-8 divisor of S near the cap (no tail -> no in-kernel masking).
    t = cap // 8 * 8
    while t >= max(8, cap // 2):
        if S % t == 0:
            return t
        t -= 8
    return cap // 8 * 8                                      # tail handled in-kernel


def _masked_avg_kernel(x_ref, m_ref, o_ref, num_acc, den_acc, *, s_total, ts):
    # x_ref: (TB, TS, TD)   m_ref: (TB, TS, 1) f32 (1.0 = valid)   o_ref: (TB, TD)
    # num_acc: (TB, TD) f32   den_acc: (TB, 1) f32
    k = pl.program_id(2)

    @pl.when(k == 0)
    def _():
        num_acc[...] = jnp.zeros_like(num_acc)
        den_acc[...] = jnp.zeros_like(den_acc)

    x = x_ref[...]
    keep = m_ref[...] > 0.5                                   # (TB, TS, 1) bool
    if s_total % ts != 0:
        # Last block along S reaches past the array; those reads are garbage -> mask them.
        s_idx = jax.lax.broadcasted_iota(jnp.int32, keep.shape, dimension=1)
        keep = jnp.logical_and(keep, s_idx + k * ts < s_total)
    # Select (not multiply): possible NaN garbage in the tail never reaches the sum.
    x_kept = jnp.where(keep, x, jnp.zeros_like(x))
    num_acc[...] += jnp.sum(x_kept, axis=1, dtype=jnp.float32)     # (TB, TD)
    den_acc[...] += jnp.sum(keep.astype(jnp.float32), axis=1)      # (TB, 1)

    @pl.when(k == pl.num_programs(2) - 1)
    def _():
        # Clamp guards fully-masked rows (PyTorch would produce NaN/Inf there).
        den = jnp.maximum(den_acc[...], 1.0)
        o_ref[...] = (num_acc[...] / den).astype(o_ref.dtype)


def _mean_kernel(x_ref, o_ref, num_acc, *, s_total, ts):
    # mask=None specialization: plain mean over S with a compile-time 1/S constant.
    k = pl.program_id(2)

    @pl.when(k == 0)
    def _():
        num_acc[...] = jnp.zeros_like(num_acc)

    x = x_ref[...]
    if s_total % ts != 0:
        shape = (x.shape[0], x.shape[1], 1)
        s_idx = jax.lax.broadcasted_iota(jnp.int32, shape, dimension=1)
        x = jnp.where(s_idx + k * ts < s_total, x, jnp.zeros_like(x))
    num_acc[...] += jnp.sum(x, axis=1, dtype=jnp.float32)

    @pl.when(k == pl.num_programs(2) - 1)
    def _():
        o_ref[...] = (num_acc[...] * (1.0 / s_total)).astype(o_ref.dtype)


def global_avg_1d(x, mask=None):
    """x: (B, S, D); mask: optional (B, S) bool, True = padding. Returns (B, D)."""
    B, S, D = x.shape
    itemsize = x.dtype.itemsize

    TB = _pick_tb(B)
    nb = B // TB
    TD = _pick_td(D, TB, nb, itemsize)
    nd = D // TD
    TS = _pick_ts(S, TB, TD, itemsize)
    nk = pl.cdiv(S, TS)

    grid = (nb, nd, nk)                                       # reduction (S) axis last
    x_spec = pl.BlockSpec((TB, TS, TD), lambda b, d, k: (b, k, d))
    o_spec = pl.BlockSpec((TB, TD), lambda b, d, k: (b, d))
    cparams = pltpu.CompilerParams(
        dimension_semantics=("parallel", "parallel", "arbitrary"),
        vmem_limit_bytes=_VMEM_LIMIT,
    )

    if mask is None:
        return pl.pallas_call(
            functools.partial(_mean_kernel, s_total=S, ts=TS),
            out_shape=jax.ShapeDtypeStruct((B, D), x.dtype),
            grid=grid,
            in_specs=[x_spec],
            out_specs=o_spec,
            scratch_shapes=[pltpu.VMEM((TB, TD), jnp.float32)],
            compiler_params=cparams,
        )(x)

    # 1.0 = valid; (B, S, 1) keeps S on sublanes (like x) so the keep-broadcast is lane-wise.
    valid = (~mask).astype(jnp.float32).reshape(B, S, 1)
    m_spec = pl.BlockSpec((TB, TS, 1), lambda b, d, k: (b, k, 0))
    return pl.pallas_call(
        functools.partial(_masked_avg_kernel, s_total=S, ts=TS),
        out_shape=jax.ShapeDtypeStruct((B, D), x.dtype),
        grid=grid,
        in_specs=[x_spec, m_spec],
        out_specs=o_spec,
        scratch_shapes=[
            pltpu.VMEM((TB, TD), jnp.float32),   # numerator accumulator
            pltpu.VMEM((TB, 1), jnp.float32),    # valid-token count accumulator
        ],
        compiler_params=cparams,
    )(x, valid)


if __name__ == "__main__":
    key = jax.random.PRNGKey(0)
    kx, km, kx2, km2 = jax.random.split(key, 4)

    # Small shapes matching the module's (N, L, C) layout.
    B, S, D = 2, 8, 32
    x = jax.random.normal(kx, (B, S, D), dtype=jnp.float32)
    mask = jax.random.uniform(km, (B, S)) < 0.3               # True = padding position
    mask = mask.at[:, 0].set(False)                           # keep >= 1 valid token per row

    out_masked = global_avg_1d(x, mask)                       # masked branch
    out_mean = global_avg_1d(x, None)                         # mask=None branch
    jax.block_until_ready((out_masked, out_mean))

    valid = (~mask).astype(jnp.float32)[..., None]
    ref_masked = (x * valid).sum(axis=1) / valid.sum(axis=1)
    ref_mean = x.mean(axis=1)
    assert jnp.allclose(out_masked, ref_masked, atol=1e-5, rtol=1e-5)
    assert jnp.allclose(out_mean, ref_mean, atol=1e-5, rtol=1e-5)

    # Larger case exercising the multi-block sequence axis + in-kernel tail masking.
    B2, S2, D2 = 2, 1000, 32
    x2 = jax.random.normal(kx2, (B2, S2, D2), dtype=jnp.float32)
    mask2 = jax.random.uniform(km2, (B2, S2)) < 0.5
    mask2 = mask2.at[:, 0].set(False)
    out2 = global_avg_1d(x2, mask2)
    jax.block_until_ready(out2)
    valid2 = (~mask2).astype(jnp.float32)[..., None]
    ref2 = (x2 * valid2).sum(axis=1) / valid2.sum(axis=1)
    assert jnp.allclose(out2, ref2, atol=1e-4, rtol=1e-4)

    print("KERNEL_OK")
</pallas_src>

<mosaic_0001>
module attributes {stable_mosaic.version = 11 : i64} {
  func.func @_masked_avg_kernel(%arg0: i32, %arg1: i32, %arg2: i32, %arg3: memref<2x8x32xf32, #tpu.memory_space<vmem>>, %arg4: memref<2x8x1xf32, #tpu.memory_space<vmem>>, %arg5: memref<2x32xf32, #tpu.memory_space<vmem>>, %arg6: memref<2x32xf32, #tpu.memory_space<vmem>>, %arg7: memref<2x1xf32, #tpu.memory_space<vmem>>) attributes {dimension_semantics = [#tpu.dimension_semantics<parallel>, #tpu.dimension_semantics<parallel>, #tpu.dimension_semantics<arbitrary>], iteration_bounds = array<i64: 1, 1, 1>, scalar_prefetch = 0 : i64, scratch_operands = 2 : i64, tpu.core_type = #tpu.core_type<tc>, window_params = [{transform_indices = @transform_0, window_bounds = array<i64: 2, 8, 32>}, {transform_indices = @transform_1, window_bounds = array<i64: 2, 8, 1>}, {transform_indices = @transform_2, window_bounds = array<i64: 2, 32>}]} {
    %c0_i32 = arith.constant 0 : i32
    %0 = arith.cmpi eq, %arg2, %c0_i32 : i32
    %1 = arith.extui %0 : i1 to i32
    %c0_i32_0 = arith.constant 0 : i32
    %2 = arith.cmpi ne, %1, %c0_i32_0 : i32
    scf.if %2 {
      %cst_19 = arith.constant 0.000000e+00 : f32
      %24 = vector.broadcast %cst_19 : f32 to vector<2x32xf32>
      %c0_20 = arith.constant 0 : index
      %c0_21 = arith.constant 0 : index
      %25 = vector.load %arg6[%c0_20, %c0_21] : memref<2x32xf32, #tpu.memory_space<vmem>>, vector<2x32xf32>
      tpu.vector_store %arg6[%c0_20, %c0_21], %24 {strides = array<i32>} : memref<2x32xf32, #tpu.memory_space<vmem>>, vector<2x32xf32>,
      %cst_22 = arith.constant 0.000000e+00 : f32
      %26 = vector.broadcast %cst_22 : f32 to vector<2x1xf32>
      %c0_23 = arith.constant 0 : index
      %c0_24 = arith.constant 0 : index
      %27 = vector.load %arg7[%c0_23, %c0_24] : memref<2x1xf32, #tpu.memory_space<vmem>>, vector<2x1xf32>
      tpu.vector_store %arg7[%c0_23, %c0_24], %26 {strides = array<i32>} : memref<2x1xf32, #tpu.memory_space<vmem>>, vector<2x1xf32>,
    } else {
    }
    %c0 = arith.constant 0 : index
    %c0_1 = arith.constant 0 : index
    %c0_2 = arith.constant 0 : index
    %3 = vector.load %arg3[%c0, %c0_1, %c0_2] : memref<2x8x32xf32, #tpu.memory_space<vmem>>, vector<2x8x32xf32>
    %c0_3 = arith.constant 0 : index
    %c0_4 = arith.constant 0 : index
    %c0_5 = arith.constant 0 : index
    %4 = vector.load %arg4[%c0_3, %c0_4, %c0_5] : memref<2x8x1xf32, #tpu.memory_space<vmem>>, vector<2x8x1xf32>
    %cst = arith.constant 5.000000e-01 : f32
    %5 = vector.broadcast %cst : f32 to vector<2x8x1xf32>
    %6 = arith.cmpf ogt, %4, %5 : vector<2x8x1xf32>
    %cst_6 = arith.constant 0.000000e+00 : f32
    %7 = vector.broadcast %cst_6 : f32 to vector<2x8x32xf32>
    %8 = vector.shape_cast %6 : vector<2x8x1xi1> to vector<2x8x1xi1>
    %9 = vector.broadcast %8 : vector<2x8x1xi1> to vector<2x8x32xi1>
    %10 = arith.select %9, %3, %7 : vector<2x8x32xi1>, vector<2x8x32xf32>
    %c0_7 = arith.constant 0 : index
    %c0_8 = arith.constant 0 : index
    %11 = vector.load %arg6[%c0_7, %c0_8] : memref<2x32xf32, #tpu.memory_space<vmem>>, vector<2x32xf32>
    %cst_9 = arith.constant dense<0.000000e+00> : vector<2x32xf32>
    %12 = vector.multi_reduction <add>, %10, %cst_9 [1] : vector<2x8x32xf32> to vector<2x32xf32>
    %13 = arith.addf %11, %12 : vector<2x32xf32>
    %c0_10 = arith.constant 0 : index
    %c0_11 = arith.constant 0 : index
    %14 = vector.load %arg6[%c0_10, %c0_11] : memref<2x32xf32, #tpu.memory_space<vmem>>, vector<2x32xf32>
    tpu.vector_store %arg6[%c0_10, %c0_11], %13 {strides = array<i32>} : memref<2x32xf32, #tpu.memory_space<vmem>>, vector<2x32xf32>,
    %c0_12 = arith.constant 0 : index
    %c0_13 = arith.constant 0 : index
    %15 = vector.load %arg7[%c0_12, %c0_13] : memref<2x1xf32, #tpu.memory_space<vmem>>, vector<2x1xf32>
    %16 = arith.extui %6 : vector<2x8x1xi1> to vector<2x8x1xi32>
    %17 = arith.sitofp %16 : vector<2x8x1xi32> to vector<2x8x1xf32>
    %cst_14 = arith.constant dense<0.000000e+00> : vector<2x1xf32>
    %18 = vector.multi_reduction <add>, %17, %cst_14 [1] : vector<2x8x1xf32> to vector<2x1xf32>
    %19 = arith.addf %15, %18 : vector<2x1xf32>
    %c0_15 = arith.constant 0 : index
    %c0_16 = arith.constant 0 : index
    %20 = vector.load %arg7[%c0_15, %c0_16] : memref<2x1xf32, #tpu.memory_space<vmem>>, vector<2x1xf32>
    tpu.vector_store %arg7[%c0_15, %c0_16], %19 {strides = array<i32>} : memref<2x1xf32, #tpu.memory_space<vmem>>, vector<2x1xf32>,
    %c0_i32_17 = arith.constant 0 : i32
    %21 = arith.cmpi eq, %arg2, %c0_i32_17 : i32
    %22 = arith.extui %21 : i1 to i32
    %c0_i32_18 = arith.constant 0 : i32
    %23 = arith.cmpi ne, %22, %c0_i32_18 : i32
    scf.if %23 {
      %c0_19 = arith.constant 0 : index
      %c0_20 = arith.constant 0 : index
      %24 = vector.load %arg7[%c0_19, %c0_20] : memref<2x1xf32, #tpu.memory_space<vmem>>, vector<2x1xf32>
      %cst_21 = arith.constant 1.000000e+00 : f32
      %25 = vector.broadcast %cst_21 : f32 to vector<2x1xf32>
      %26 = arith.maximumf %24, %25 : vector<2x1xf32>
      %c0_22 = arith.constant 0 : index
      %c0_23 = arith.constant 0 : index
      %27 = vector.load %arg6[%c0_22, %c0_23] : memref<2x32xf32, #tpu.memory_space<vmem>>, vector<2x32xf32>
      %28 = vector.broadcast %26 : vector<2x1xf32> to vector<2x32xf32>
      %29 = arith.divf %27, %28 : vector<2x32xf32>
      %c0_24 = arith.constant 0 : index
      %c0_25 = arith.constant 0 : index
      %30 = vector.load %arg5[%c0_24, %c0_25] : memref<2x32xf32, #tpu.memory_space<vmem>>, vector<2x32xf32>
      tpu.vector_store %arg5[%c0_24, %c0_25], %29 {strides = array<i32>} : memref<2x32xf32, #tpu.memory_space<vmem>>, vector<2x32xf32>,
    } else {
    }
    return
  }
  func.func @transform_0(%arg0: i32, %arg1: i32, %arg2: i32) -> (i32, i32, i32) {
    %c0_i32 = arith.constant 0 : i32
    return %arg0, %arg2, %arg1 : i32, i32, i32
  }
  func.func @transform_1(%arg0: i32, %arg1: i32, %arg2: i32) -> (i32, i32, i32) {
    %c0_i32 = arith.constant 0 : i32
    %c0_i32_0 = arith.constant 0 : i32
    return %arg0, %arg2, %c0_i32 : i32, i32, i32
  }
  func.func @transform_2(%arg0: i32, %arg1: i32, %arg2: i32) -> (i32, i32) {
    %c0_i32 = arith.constant 0 : i32
    return %arg0, %arg1 : i32, i32
  }
}

</mosaic_0001>

<llo_original>
// kernel: tpu_custom_call.1
$region0: #{tpu_custom_call.1}
  #allocation0 [shape = 'u32[]', space=smem, size = 0x4, offset = 0x4, fixed_abs, tag = 'smem constant byte address 0x4 - core index']
  #allocation1 [shape = 'u32[72,128]{1,0:T(1,128)}', space=vmem, size = 0x9000, scoped, tag = 'internal scratch']
  #allocation2 [shape = 'f32[2,32]{1,0:T(2,128)}', space=vmem, size = 0x400, scoped, tag = 'scratch operand']
  #allocation3 [shape = 'f32[2,1]{1,0:T(2,128)}', space=vmem, size = 0x400, scoped, tag = 'scratch operand']
  %s0 = inlined_call_operand.vmem [shape: f32[2,8,32], index: 0, kind: input, shape index: {}]
  %s1 = inlined_call_operand.vmem [shape: f32[2,8,1], index: 1, kind: input, shape index: {}]
  %s2 = inlined_call_operand.hbm [shape: f32[2,32], index: 2, kind: output, shape index: {}]
  %s3 = sld [smem:[#allocation0]]
  $region26: #{tpu_custom_call.1} parent=0
    _
  %s5 = ssub.s32 1, %s3
  %s6 = scalar_select 0, %s5, %s3
  $region1: #{tpu_custom_call.1} parent=0
    #allocation4 [shape = 'u8[1024]{0}', space=vmem, size = 0x400, scoped, tag = 'output window, operand 0, single buffered']
    #allocation5 [shape = 's32[1]{0}', space=sflag, size = 0x4, scoped, tag = 'scoped memory for tpu_custom_call.1']
    %7 = vsyncpa [#allocation5], 0
    // Predicated region
    $region2: #{tpu_custom_call.1} parent=1 // pred_check
      _
    $region3: #{tpu_custom_call.1} parent=1 // pred_check_branch
      %9 = sbr.rel (0) target = $region5
    $region4: #{tpu_custom_call.1} parent=1 // pred_region
      _
    $region5: #{tpu_custom_call.1} parent=1 // pred_fallthru
      _
    // Predicated region
    $region6: #{tpu_custom_call.1} parent=1 // pred_check
      _
    $region7: #{tpu_custom_call.1} parent=1 // pred_check_branch
      %11 = sbr.rel (0) target = $region9
    $region8: #{tpu_custom_call.1} parent=1 // pred_region
      _
    $region9: #{tpu_custom_call.1} parent=1 // pred_fallthru
      _
    %p12 = scmp.eq.s32.totalorder 0, 0
    // Predicated region
    $region10: #{tpu_custom_call.1} parent=1 // pred_check
      %p13 = pneg %p12
    $region11: #{tpu_custom_call.1} parent=1 // pred_check_branch
      %15 = sbr.rel (%p13) target = $region13
    $region12: #{tpu_custom_call.1} parent=1 // pred_region
      %vm16 = vcmask 254976
      %17 = vst.msk [vmem:[#allocation2] sm:$0x3] %vm16, 0.0
      %vm18 = vcmask 1024
      %19 = vst.msk [vmem:[#allocation3] sm:$0x3] %vm18, 0.0
    $region13: #{tpu_custom_call.1} parent=1 // pred_fallthru
      _
    %v20 = vld [vmem:[%s0] sm:$0xff]
    %v21 = vld [vmem:[%s0 + $0x8] sm:$0xff]
    %v22 = vld [vmem:[%s1] sm:$0xff]
    %v23 = vld [vmem:[%s1 + $0x8] sm:$0xff]
    %vm24 = vcmp.gt.f32.partialorder %v22, 0.5
    %vm25 = vcmp.gt.f32.partialorder %v23, 0.5
    %v26 = vsel %vm24, 1, 0
    %v27 = vsel %vm25, 1, 0
    %28 = vset.pattern.permute.xlu0 0
    %29 = vperm.xlu0 %28, %v26
    %v30 = vpop.permute.xlu0 %29
    %31 = vset.pattern.permute.xlu0 0
    %32 = vperm.xlu0 %31, %v27
    %v33 = vpop.permute.xlu0 %32
    %vm34 = vcmp.eq.s32.totalorder %v30, 1
    %vm35 = vcmp.eq.s32.totalorder %v33, 1
    %v36 = vsel %vm34, %v20, 0.0
    %v37 = vsel %vm35, %v21, 0.0
    %v38 = vld [vmem:[#allocation2] sm:$0x3]
    %vm39 = vcmask 261120
    %v40 = vsel %vm39, %v36, 0.0
    %v41 = vrot.slane %v40, 4
    %v42 = vadd.f32 %v40, %v41
    %v43 = vrot.slane %v42, 2
    %v44 = vadd.f32 %v42, %v43
    %v45 = vrot.slane %v44, 1
    %v46 = vadd.f32 %v44, %v45
    %v47 = vsel %vm39, %v37, 0.0
    %v48 = vrot.slane %v47, 4
    %v49 = vadd.f32 %v47, %v48
    %v50 = vrot.slane %v49, 2
    %v51 = vadd.f32 %v49, %v50
    %v52 = vrot.slane %v51, 1
    %v53 = vadd.f32 %v51, %v52
    %vm56 = vcmask 1041409
    %v57 = vsel %vm56, %v53, %v46
    %v59 = vadd.f32 %v38, %v57
    %vm60 = vcmask 254976
    %61 = vst.msk [vmem:[#allocation2] sm:$0x3] %vm60, %v59
    %v62 = vld [vmem:[#allocation3] sm:$0x3]
    %v63 = vcvt.s32.f32 %v26
    %v64 = vcvt.s32.f32 %v27
    %vm65 = vcmask 7168
    %v66 = vsel %vm65, %v63, 0.0
    %v67 = vrot.slane %v66, 4
    %v68 = vadd.f32 %v66, %v67
    %v69 = vrot.slane %v68, 2
    %v70 = vadd.f32 %v68, %v69
    %v71 = vrot.slane %v70, 1
    %v72 = vadd.f32 %v70, %v71
    %v73 = vsel %vm65, %v64, 0.0
    %v74 = vrot.slane %v73, 4
    %v75 = vadd.f32 %v73, %v74
    %v76 = vrot.slane %v75, 2
    %v77 = vadd.f32 %v75, %v76
    %v78 = vrot.slane %v77, 1
    %v79 = vadd.f32 %v77, %v78
    %v82 = vsel %vm56, %v79, %v72
    %v84 = vadd.f32 %v62, %v82
    %vm85 = vcmask 1024
    %86 = vst.msk [vmem:[#allocation3] sm:$0x3] %vm85, %v84
    // Predicated region
    $region14: #{tpu_custom_call.1} parent=1 // pred_check
      %p87 = pneg %p12
    $region15: #{tpu_custom_call.1} parent=1 // pred_check_branch
      %89 = sbr.rel (%p87) target = $region17
    $region16: #{tpu_custom_call.1} parent=1 // pred_region
      %v90 = vld [vmem:[#allocation3] sm:$0x3]
      %v91 = vmax.f32 %v90, 1.0
      %v92 = vld [vmem:[#allocation2] sm:$0x3]
      %94 = vset.pattern.permute.xlu0 0
      %95 = vperm.xlu0 %94, %v91
      %v96 = vpop.permute.xlu0 %95
      %v98 = vrcp.pop %v96
      %v99 = vmul.f32 %v96, %v98
      %v100 = vsub.f32 1.0, %v99
      %v101 = vmul.f32 %v98, %v100
      %v102 = vadd.f32 %v98, %v101
      %vm103 = vweird.f32 %v96
      %vm104 = vweird.f32 %v98
      %vm105 = vmor %vm103, %vm104
      %v106 = vsel %vm105, %v98, %v102
      %v107 = vand.u32 2147483647, %v96
      %vm108 = vcmp.eq.f32.partialorder %v107, 8.507059e+37
      %v109 = vand.u32 %v96, 2147483648
      %v110 = vor.u32 1.1754944e-38, %v109
      %v111 = vsel %vm108, %v110, %v106
      %v112 = vmul.f32 %v92, %v111
      %113 = vst.msk [vmem:[#allocation4] sm:$0x3] %vm60, %v112
    $region17: #{tpu_custom_call.1} parent=1 // pred_fallthru
      _
    // Predicated region
    $region18: #{tpu_custom_call.1} parent=1 // pred_check
      _
    $region19: #{tpu_custom_call.1} parent=1 // pred_check_branch
      %115 = sbr.rel (0) target = $region21
    $region20: #{tpu_custom_call.1} parent=1 // pred_region
      %117 = vsyncadd [#allocation5], 0
      %s119 = sshll.u32 [#allocation4], 4
      %s120 = int_to_ptr.vmem [resolvable:$true] %s119
      %s121 = sshll.u32 %s2, 4
      %s122 = int_to_ptr.hbm [resolvable:$true] %s121
      %124 = dma.vmem_to_hbm [thread:$0]  %s120, 32, %s122, [#allocation5]
    $region21: #{tpu_custom_call.1} parent=1 // pred_fallthru
      _
    // Predicated region
    $region22: #{tpu_custom_call.1} parent=1 // pred_check
      _
    $region23: #{tpu_custom_call.1} parent=1 // pred_check_branch
      %126 = sbr.rel (0) target = $region25
    $region24: #{tpu_custom_call.1} parent=1 // pred_region
      %128 = dma.done [#allocation5], 32
    $region25: #{tpu_custom_call.1} parent=1 // pred_fallthru
      _
    %129 = vsyncpa [#allocation5], 1

</llo_original>
